<compile_context>
chip_gen: v7x
topology: tpu7x:2x2x1
jax: 0.10.0
libtpu: 0.0.40
codegen_flags: <defaults>
</compile_context>

<pallas_src>
import functools

import jax
import jax.numpy as jnp
from jax.experimental import pallas as pl
from jax.experimental.pallas import tpu as pltpu


def _make_divisible(v, divisor=8, min_value=None):
    if min_value is None:
        min_value = divisor
    new_v = max(min_value, int(v + divisor / 2) // divisor * divisor)
    if new_v < 0.9 * v:
        new_v += divisor
    return new_v


def _vmem_capacity_bytes():
    """Physical VMEM per TensorCore; conservative 64 MiB (v7x) fallback."""
    try:
        info = pltpu.get_tpu_info()
        cap = getattr(info, "vmem_capacity_bytes", None)
        if cap:
            return int(cap)
    except Exception:
        pass
    return 64 << 20


def _choose_batch_tile(B, C, per_batch_bytes, target_bytes):
    """Largest bt dividing B such that the (bt*C, HW) block fits the budget,
    the sublane dim is aligned (bt*C % 8 == 0, or the block spans all rows),
    and there are >= min(4, B) grid steps (>= 2 per TensorCore on v7x).
    Returns None when nothing fits -> caller uses the two-phase fallback."""
    min_steps = min(4, B)
    best = None
    for bt in range(1, B + 1):
        if B % bt:
            continue
        if bt * per_batch_bytes > target_bytes:
            continue
        if (bt * C) % 8 != 0 and bt != B:
            continue
        if B // bt < min_steps:
            continue
        best = bt
    return best


def _se_kernel(x_ref, w1t_ref, b1_ref, w2t_ref, b2_ref, o_ref, *, inv_hw):
    # x_ref block: (bt*C, HW), lane-dense spatial axis.
    rows = x_ref.shape[0]
    C = w1t_ref.shape[0]
    bt = rows // C

    # --- squeeze: one cross-lane reduce per row (f32 accumulation), * 1/HW ---
    pooled = jnp.sum(x_ref[...].astype(jnp.float32), axis=-1, keepdims=True) * inv_hw
    pooled = pooled.reshape(bt, C)                         # tiny relayout

    # --- excite: two tiny f32 linears batched over the bt rows in this block ---
    h = jnp.dot(pooled, w1t_ref[...], preferred_element_type=jnp.float32) + b1_ref[...]
    h = jnp.maximum(h, 0.0)                                # ReLU        (bt, hidden)
    y = jnp.dot(h, w2t_ref[...], preferred_element_type=jnp.float32) + b2_ref[...]
    # HardSigmoid: relu6(y + 3) / 6
    y = jnp.clip(y + 3.0, 0.0, 6.0) * (1.0 / 6.0)          # (bt, C)

    # --- scale: cast the tiny gate once, keep the big pass in native dtype ---
    gate = y.reshape(rows, 1).astype(o_ref.dtype)          # (rows, 1)
    o_ref[...] = x_ref[...] * gate                         # lane broadcast


def _scale_kernel(x_ref, g_ref, o_ref):
    o_ref[...] = x_ref[...] * g_ref[...]


def _se_scale_two_phase(x2, gate_col, HW, target_block_bytes, vmem_limit_bytes):
    """Gridded elementwise scale over (rows, HW) tiles (fallback path)."""
    R = x2.shape[0]
    itemsize = x2.dtype.itemsize

    if HW <= 128:
        hwt = HW
    else:
        hwt = max(128, min((HW // 128) * 128,
                           ((target_block_bytes // (8 * itemsize)) // 128) * 128))
    if R <= 8:
        rt = R
    else:
        rt = max(8, min((R // 8) * 8,
                        ((target_block_bytes // (hwt * itemsize)) // 8) * 8))

    grid = (pl.cdiv(R, rt), pl.cdiv(HW, hwt))
    return pl.pallas_call(
        _scale_kernel,
        out_shape=jax.ShapeDtypeStruct((R, HW), x2.dtype),
        grid_spec=pltpu.PrefetchScalarGridSpec(
            num_scalar_prefetch=0,
            grid=grid,
            in_specs=[
                pl.BlockSpec((rt, hwt), lambda r, h: (r, h)),
                pl.BlockSpec((rt, 1), lambda r, h: (r, 0)),
            ],
            out_specs=pl.BlockSpec((rt, hwt), lambda r, h: (r, h)),
        ),
        compiler_params=pltpu.CompilerParams(
            dimension_semantics=("parallel", "parallel"),
            vmem_limit_bytes=int(vmem_limit_bytes),
        ),
    )(x2, gate_col)


def se_layer(x, w1, b1, w2, b2, *, target_block_bytes=None, vmem_limit_bytes=None):
    """x: (B, C, H, W).  w1: (hidden, C[,1,1]), b1: (hidden,) or (hidden,1),
    w2: (C, hidden[,1,1]), b2: (C,) or (C,1).  Returns (B, C, H, W)."""
    B, C, H, W = x.shape
    hidden = w1.shape[0]
    HW = H * W

    # Generation-aware budgets (128 MiB VMEM on v5e/v6e, 64 MiB per TC on v7x).
    cap = _vmem_capacity_bytes()
    if target_block_bytes is None:
        # 2 in-flight input + 2 output buffers per step -> keep 4*block << VMEM.
        target_block_bytes = min(8 << 20, cap // 16)     # 8 MiB (v5e/v6e), 4 MiB (v7x)
    if vmem_limit_bytes is None:
        vmem_limit_bytes = (cap * 3) // 4                # 96 MiB (v5e/v6e), 48 MiB (v7x)

    # Flattened, pad-free layout: rows on sublanes, lane-dense spatial axis.
    x2 = x.reshape(B * C, HW)
    # Weights with the reduced dim first / output dim last; biases lane-major.
    w1t = jnp.asarray(w1).reshape(hidden, C).T.astype(jnp.float32)   # (C, hidden)
    w2t = jnp.asarray(w2).reshape(C, hidden).T.astype(jnp.float32)   # (hidden, C)
    b1r = jnp.asarray(b1).reshape(1, hidden).astype(jnp.float32)
    b2r = jnp.asarray(b2).reshape(1, C).astype(jnp.float32)

    per_batch_bytes = C * HW * x.dtype.itemsize
    bt = _choose_batch_tile(B, C, per_batch_bytes, target_block_bytes)

    if bt is None:
        # A single batch's (C, HW) slab doesn't fit the block budget (or can't
        # be sublane-aligned).  Two-phase path: the tiny gate comes from an XLA
        # pooled mean + MLP (negligible next to the streaming pass); the
        # dominant scale pass is a gridded elementwise Pallas kernel.
        pooled = jnp.mean(x2.astype(jnp.float32), axis=-1).reshape(B, C)
        h = jnp.maximum(pooled @ w1t + b1r, 0.0)
        y = h @ w2t + b2r
        gate = (jnp.clip(y + 3.0, 0.0, 6.0) * (1.0 / 6.0))
        gate_col = gate.reshape(B * C, 1).astype(x.dtype)
        out = _se_scale_two_phase(x2, gate_col, HW, target_block_bytes, vmem_limit_bytes)
        return out.reshape(B, C, H, W)

    grid = (B // bt,)
    kernel = functools.partial(_se_kernel, inv_hw=1.0 / HW)
    full = lambda shape: pl.BlockSpec(shape, lambda b: (0,) * len(shape))

    out = pl.pallas_call(
        kernel,
        out_shape=jax.ShapeDtypeStruct((B * C, HW), x.dtype),
        grid_spec=pltpu.PrefetchScalarGridSpec(
            num_scalar_prefetch=0,
            grid=grid,
            in_specs=[
                pl.BlockSpec((bt * C, HW), lambda b: (b, 0)),
                full((C, hidden)),
                full((1, hidden)),
                full((hidden, C)),
                full((1, C)),
            ],
            out_specs=pl.BlockSpec((bt * C, HW), lambda b: (b, 0)),
        ),
        compiler_params=pltpu.CompilerParams(
            dimension_semantics=("parallel",),
            vmem_limit_bytes=int(vmem_limit_bytes),
        ),
    )(x2, w1t, b1r, w2t, b2r)
    return out.reshape(B, C, H, W)


def se_layer_ref(x, w1, b1, w2, b2):
    pooled = jnp.mean(x.astype(jnp.float32), axis=(2, 3))          # (B, C)
    h = jnp.maximum(pooled @ w1.T + b1.reshape(-1), 0.0)           # (B, hidden)
    y = h @ w2.T + b2.reshape(-1)                                  # (B, C)
    y = jnp.clip(y + 3.0, 0.0, 6.0) / 6.0
    return (x.astype(jnp.float32) * y[:, :, None, None]).astype(x.dtype)


if __name__ == "__main__":
    # Module config: SELayer(inp=8, oup=8, reduction=4) -> hidden = _make_divisible(2) = 8
    inp = oup = 8
    reduction = 4
    hidden = _make_divisible(inp // reduction)

    B, C, H, W = 2, oup, 16, 16

    key = jax.random.PRNGKey(0)
    kx, k1, k2, k3, k4 = jax.random.split(key, 5)
    x = jax.random.normal(kx, (B, C, H, W), dtype=jnp.float32)

    # Deterministic synthetic params (Conv2d 1x1 weights reshaped to 2-D).
    w1 = jax.random.normal(k1, (hidden, oup), dtype=jnp.float32) * 0.1
    b1 = jax.random.normal(k2, (hidden, 1), dtype=jnp.float32) * 0.1
    w2 = jax.random.normal(k3, (oup, hidden), dtype=jnp.float32) * 0.1
    b2 = jax.random.normal(k4, (oup, 1), dtype=jnp.float32) * 0.1

    out = se_layer(x, w1, b1, w2, b2)
    out = jax.block_until_ready(out)

    ref = se_layer_ref(x, w1, b1, w2, b2)
    assert out.shape == (B, C, H, W)
    assert jnp.allclose(out, ref, atol=1e-5, rtol=1e-5)

    print("KERNEL_OK")
</pallas_src>

<mosaic_0001>
module attributes {stable_mosaic.version = 11 : i64} {
  func.func @_se_kernel(%arg0: i32, %arg1: memref<8x256xf32, #tpu.memory_space<vmem>>, %arg2: memref<8x8xf32, #tpu.memory_space<vmem>>, %arg3: memref<1x8xf32, #tpu.memory_space<vmem>>, %arg4: memref<8x8xf32, #tpu.memory_space<vmem>>, %arg5: memref<1x8xf32, #tpu.memory_space<vmem>>, %arg6: memref<8x256xf32, #tpu.memory_space<vmem>>) attributes {dimension_semantics = [#tpu.dimension_semantics<parallel>], iteration_bounds = array<i64: 2>, scalar_prefetch = 0 : i64, scratch_operands = 0 : i64, tpu.core_type = #tpu.core_type<tc>, window_params = [{transform_indices = @transform_0, window_bounds = array<i64: 8, 256>}, {pipeline_mode = #tpu.pipeline_mode<synchronous>, transform_indices = @transform_1, window_bounds = array<i64: 8, 8>}, {pipeline_mode = #tpu.pipeline_mode<synchronous>, transform_indices = @transform_2, window_bounds = array<i64: 1, 8>}, {pipeline_mode = #tpu.pipeline_mode<synchronous>, transform_indices = @transform_3, window_bounds = array<i64: 8, 8>}, {pipeline_mode = #tpu.pipeline_mode<synchronous>, transform_indices = @transform_4, window_bounds = array<i64: 1, 8>}, {transform_indices = @transform_5, window_bounds = array<i64: 8, 256>}]} {
    %c0 = arith.constant 0 : index
    %c0_0 = arith.constant 0 : index
    %0 = vector.load %arg1[%c0, %c0_0] : memref<8x256xf32, #tpu.memory_space<vmem>>, vector<8x256xf32>
    %cst = arith.constant dense<0.000000e+00> : vector<8xf32>
    %1 = vector.multi_reduction <add>, %0, %cst [1] : vector<8x256xf32> to vector<8xf32>
    %2 = vector.shape_cast %1 : vector<8xf32> to vector<8x1xf32>
    %cst_1 = arith.constant 3.906250e-03 : f32
    %3 = vector.broadcast %cst_1 : f32 to vector<8x1xf32>
    %4 = arith.mulf %2, %3 : vector<8x1xf32>
    %5 = vector.shape_cast %4 : vector<8x1xf32> to vector<1x8xf32>
    %c0_2 = arith.constant 0 : index
    %c0_3 = arith.constant 0 : index
    %6 = vector.load %arg2[%c0_2, %c0_3] : memref<8x8xf32, #tpu.memory_space<vmem>>, vector<8x8xf32>
    %cst_4 = arith.constant dense<0.000000e+00> : vector<1x8xf32>
    %7 = tpu.matmul %5, %6, %cst_4 {dimension_numbers = #tpu.dot_dimension_numbers<[1], [0], [0], [1], [0, 0, 1, 1], [], []>} : vector<1x8xf32>, vector<8x8xf32>, vector<1x8xf32> -> vector<1x8xf32>
    %c0_5 = arith.constant 0 : index
    %c0_6 = arith.constant 0 : index
    %8 = vector.load %arg3[%c0_5, %c0_6] : memref<1x8xf32, #tpu.memory_space<vmem>>, vector<1x8xf32>
    %9 = arith.addf %7, %8 : vector<1x8xf32>
    %cst_7 = arith.constant 0.000000e+00 : f32
    %10 = vector.broadcast %cst_7 : f32 to vector<1x8xf32>
    %11 = arith.maximumf %9, %10 : vector<1x8xf32>
    %c0_8 = arith.constant 0 : index
    %c0_9 = arith.constant 0 : index
    %12 = vector.load %arg4[%c0_8, %c0_9] : memref<8x8xf32, #tpu.memory_space<vmem>>, vector<8x8xf32>
    %cst_10 = arith.constant dense<0.000000e+00> : vector<1x8xf32>
    %13 = tpu.matmul %11, %12, %cst_10 {dimension_numbers = #tpu.dot_dimension_numbers<[1], [0], [0], [1], [0, 0, 1, 1], [], []>} : vector<1x8xf32>, vector<8x8xf32>, vector<1x8xf32> -> vector<1x8xf32>
    %c0_11 = arith.constant 0 : index
    %c0_12 = arith.constant 0 : index
    %14 = vector.load %arg5[%c0_11, %c0_12] : memref<1x8xf32, #tpu.memory_space<vmem>>, vector<1x8xf32>
    %15 = arith.addf %13, %14 : vector<1x8xf32>
    %cst_13 = arith.constant 3.000000e+00 : f32
    %16 = vector.broadcast %cst_13 : f32 to vector<1x8xf32>
    %17 = arith.addf %15, %16 : vector<1x8xf32>
    %cst_14 = arith.constant 0.000000e+00 : f32
    %cst_15 = arith.constant 6.000000e+00 : f32
    %18 = vector.broadcast %cst_14 : f32 to vector<1x8xf32>
    %19 = arith.maximumf %18, %17 : vector<1x8xf32>
    %20 = vector.broadcast %cst_15 : f32 to vector<1x8xf32>
    %21 = arith.minimumf %20, %19 : vector<1x8xf32>
    %cst_16 = arith.constant 0.166666672 : f32
    %22 = vector.broadcast %cst_16 : f32 to vector<1x8xf32>
    %23 = arith.mulf %21, %22 : vector<1x8xf32>
    %24 = vector.shape_cast %23 : vector<1x8xf32> to vector<8x1xf32>
    %c0_17 = arith.constant 0 : index
    %c0_18 = arith.constant 0 : index
    %25 = vector.load %arg1[%c0_17, %c0_18] : memref<8x256xf32, #tpu.memory_space<vmem>>, vector<8x256xf32>
    %26 = vector.broadcast %24 : vector<8x1xf32> to vector<8x256xf32>
    %27 = arith.mulf %25, %26 : vector<8x256xf32>
    %c0_19 = arith.constant 0 : index
    %c0_20 = arith.constant 0 : index
    %28 = vector.load %arg6[%c0_19, %c0_20] : memref<8x256xf32, #tpu.memory_space<vmem>>, vector<8x256xf32>
    tpu.vector_store %arg6[%c0_19, %c0_20], %27 {strides = array<i32>} : memref<8x256xf32, #tpu.memory_space<vmem>>, vector<8x256xf32>,
    return
  }
  func.func @transform_0(%arg0: i32) -> (i32, i32) {
    %c0_i32 = arith.constant 0 : i32
    %c0_i32_0 = arith.constant 0 : i32
    return %arg0, %c0_i32 : i32, i32
  }
  func.func @transform_1(%arg0: i32) -> (i32, i32) {
    %c0_i32 = arith.constant 0 : i32
    %c0_i32_0 = arith.constant 0 : i32
    %c0_i32_1 = arith.constant 0 : i32
    return %c0_i32, %c0_i32_0 : i32, i32
  }
  func.func @transform_2(%arg0: i32) -> (i32, i32) {
    %c0_i32 = arith.constant 0 : i32
    %c0_i32_0 = arith.constant 0 : i32
    %c0_i32_1 = arith.constant 0 : i32
    return %c0_i32, %c0_i32_0 : i32, i32
  }
  func.func @transform_3(%arg0: i32) -> (i32, i32) {
    %c0_i32 = arith.constant 0 : i32
    %c0_i32_0 = arith.constant 0 : i32
    %c0_i32_1 = arith.constant 0 : i32
    return %c0_i32, %c0_i32_0 : i32, i32
  }
  func.func @transform_4(%arg0: i32) -> (i32, i32) {
    %c0_i32 = arith.constant 0 : i32
    %c0_i32_0 = arith.constant 0 : i32
    %c0_i32_1 = arith.constant 0 : i32
    return %c0_i32, %c0_i32_0 : i32, i32
  }
  func.func @transform_5(%arg0: i32) -> (i32, i32) {
    %c0_i32 = arith.constant 0 : i32
    %c0_i32_0 = arith.constant 0 : i32
    return %arg0, %c0_i32 : i32, i32
  }
}

</mosaic_0001>

<llo_original>
// kernel: tpu_custom_call.1
$region0: #{tpu_custom_call.1}
  #allocation0 [shape = 'u32[]', space=smem, size = 0x4, offset = 0x4, fixed_abs, tag = 'smem constant byte address 0x4 - core index']
  #allocation1 [shape = 'u32[144,128]{1,0:T(1,128)}', space=vmem, size = 0x12000, scoped, tag = 'internal scratch']
  %s0 = inlined_call_operand.hbm [shape: f32[16,256], index: 0, kind: input, shape index: {}]
  %s1 = inlined_call_operand.hbm [shape: f32[8,8], index: 1, kind: input, shape index: {}]
  %s2 = inlined_call_operand.vmem [shape: f32[1,8], index: 2, kind: input, shape index: {}]
  %s3 = inlined_call_operand.vmem [shape: f32[8,8], index: 3, kind: input, shape index: {}]
  %s4 = inlined_call_operand.vmem [shape: f32[1,8], index: 4, kind: input, shape index: {}]
  %s5 = inlined_call_operand.hbm [shape: f32[16,256], index: 5, kind: output, shape index: {}]
  %s6 = sld [smem:[#allocation0]]
  $region61: #{tpu_custom_call.1} parent=0
    _
  %s8 = ssub.s32 1, %s6
  %s9 = scalar_select 0, %s8, %s6
  $region1: #{tpu_custom_call.1} parent=0
    #allocation2 [shape = 'u8[16384]{0}', space=vmem, size = 0x4000, scoped, tag = 'input window, operand 0']
    #allocation3 [shape = 's32[2]{0}', space=sflag, size = 0x8, scoped, tag = 'scoped memory for tpu_custom_call.1']
    #allocation4 [shape = 's32[2]{0}', space=sflag, size = 0x8, scoped, tag = 'scoped memory for tpu_custom_call.1']
    #allocation5 [shape = 'u8[4096]{0}', space=vmem, size = 0x1000, scoped, tag = 'input window, operand 1, single buffered']
    #allocation6 [shape = 's32[1]{0}', space=sflag, size = 0x4, scoped, tag = 'scoped memory for tpu_custom_call.1']
    #allocation7 [shape = 'u8[16384]{0}', space=vmem, size = 0x4000, scoped, tag = 'output window, operand 0']
    %10 = vsyncpa [#allocation3], 0
    %s11 = scalar_lea.sflag [#allocation3], 1
    %12 = vsyncpa %s11, 0
    %13 = vsyncpa [#allocation6], 0
    %14 = vsyncpa [#allocation4], 0
    %s15 = scalar_lea.sflag [#allocation4], 1
    %16 = vsyncpa %s15, 0
    loop: start=0, step=1, limit=4
    $region2: #{tpu_custom_call.1} parent=1 // loop_pre_header
      _
    $region3: #{tpu_custom_call.1} parent=1 // loop_header
      %s18 = sphi 0, %s22
      %p19 = scmp.ge.s32.totalorder %s18, 4
      %s28 = sphi 0, %s30
      %s31 = sphi 0, %s28
      %s32 = sphi 0, %s31
      %s48 = sphi 0, %s32
      %s52 = sphi 0, %s52
      %s54 = sphi 0, %s52
      %s55 = sphi 0, %s54
      %s69 = sphi 0, %s55
      %s73 = sphi 0, %s73
      %s75 = sphi 0, %s73
      %s76 = sphi 0, %s75
      %s90 = sphi 0, %s76
      %s94 = sphi 0, %s94
      %s96 = sphi 0, %s94
      %s97 = sphi 0, %s96
      %s111 = sphi 0, %s97
      %s115 = sphi 0, %s115
      %s117 = sphi 0, %s115
      %s118 = sphi 0, %s117
      %s132 = sphi 0, %s118
      %s138 = sphi 0, %s140
      %s141 = sphi 0, %s138
      %s142 = sphi 0, %s141
      %s158 = sphi 0, %s142
    $region4: #{tpu_custom_call.1} parent=1 // loop_header_branch
      %21 = sbr.rel (%p19) target = $region8
    $region5: #{tpu_custom_call.1} parent=1 // loop_body
      %s23 = ssub.s32 %s18, 1
      %s24 = ssub.s32 %s18, 2
      %s25 = sadd.s32 %s18, 1
      %s26 = ssub.s32 %s18, %s25
      %p27 = scmp.eq.s32.totalorder %s26, 0
      %s29 = sadd.s32 %s28, 1
      %s30 = scalar_select %p27, %s28, %s29
      %p33 = pneg %p27
      %p34 = scmp.eq.s32.totalorder %s18, 1
      %p35 = por %p33, %p34
      %p36 = scmp.ne.s32.totalorder %s28, %s31
      %p37 = scmp.eq.s32.totalorder %s18, 0
      %p38 = por %p36, %p37
      %p39 = scmp.ne.s32.totalorder %s28, %s31
      %p40 = scmp.eq.s32.totalorder %s23, 1
      %p41 = por %p39, %p40
      %p42 = scmp.ne.s32.totalorder %s31, %s32
      %p43 = scmp.eq.s32.totalorder %s23, 0
      %p44 = por %p42, %p43
      %p45 = scmp.ne.s32.totalorder %s31, %s32
      %p46 = scmp.eq.s32.totalorder %s24, 1
      %p47 = por %p45, %p46
      %p49 = scmp.ne.s32.totalorder %s32, %s48
      %p50 = scmp.eq.s32.totalorder %s24, 0
      %p51 = por %p49, %p50
      %s53 = sadd.s32 %s52, 1
      %p56 = scmp.eq.s32.totalorder %s18, 1
      %p57 = scmp.ne.s32.totalorder %s52, %s54
      %p58 = scmp.eq.s32.totalorder %s18, 0
      %p59 = por %p57, %p58
      %p60 = scmp.ne.s32.totalorder %s52, %s54
      %p61 = scmp.eq.s32.totalorder %s23, 1
      %p62 = por %p60, %p61
      %p63 = scmp.ne.s32.totalorder %s54, %s55
      %p64 = scmp.eq.s32.totalorder %s23, 0
      %p65 = por %p63, %p64
      %p66 = scmp.ne.s32.totalorder %s54, %s55
      %p67 = scmp.eq.s32.totalorder %s24, 1
      %p68 = por %p66, %p67
      %p70 = scmp.ne.s32.totalorder %s55, %s69
      %p71 = scmp.eq.s32.totalorder %s24, 0
      %p72 = por %p70, %p71
      %s74 = sadd.s32 %s73, 1
      %p77 = scmp.eq.s32.totalorder %s18, 1
      %p78 = scmp.ne.s32.totalorder %s73, %s75
      %p79 = scmp.eq.s32.totalorder %s18, 0
      %p80 = por %p78, %p79
      %p81 = scmp.ne.s32.totalorder %s73, %s75
      %p82 = scmp.eq.s32.totalorder %s23, 1
      %p83 = por %p81, %p82
      %p84 = scmp.ne.s32.totalorder %s75, %s76
      %p85 = scmp.eq.s32.totalorder %s23, 0
      %p86 = por %p84, %p85
      %p87 = scmp.ne.s32.totalorder %s75, %s76
      %p88 = scmp.eq.s32.totalorder %s24, 1
      %p89 = por %p87, %p88
      %p91 = scmp.ne.s32.totalorder %s76, %s90
      %p92 = scmp.eq.s32.totalorder %s24, 0
      %p93 = por %p91, %p92
      %s95 = sadd.s32 %s94, 1
      %p98 = scmp.eq.s32.totalorder %s18, 1
      %p99 = scmp.ne.s32.totalorder %s94, %s96
      %p100 = scmp.eq.s32.totalorder %s18, 0
      %p101 = por %p99, %p100
      %p102 = scmp.ne.s32.totalorder %s94, %s96
      %p103 = scmp.eq.s32.totalorder %s23, 1
      %p104 = por %p102, %p103
      %p105 = scmp.ne.s32.totalorder %s96, %s97
      %p106 = scmp.eq.s32.totalorder %s23, 0
      %p107 = por %p105, %p106
      %p108 = scmp.ne.s32.totalorder %s96, %s97
      %p109 = scmp.eq.s32.totalorder %s24, 1
      %p110 = por %p108, %p109
      %p112 = scmp.ne.s32.totalorder %s97, %s111
      %p113 = scmp.eq.s32.totalorder %s24, 0
      %p114 = por %p112, %p113
      %s116 = sadd.s32 %s115, 1
      %p119 = scmp.eq.s32.totalorder %s18, 1
      %p120 = scmp.ne.s32.totalorder %s115, %s117
      %p121 = scmp.eq.s32.totalorder %s18, 0
      %p122 = por %p120, %p121
      %p123 = scmp.ne.s32.totalorder %s115, %s117
      %p124 = scmp.eq.s32.totalorder %s23, 1
      %p125 = por %p123, %p124
      %p126 = scmp.ne.s32.totalorder %s117, %s118
      %p127 = scmp.eq.s32.totalorder %s23, 0
      %p128 = por %p126, %p127
      %p129 = scmp.ne.s32.totalorder %s117, %s118
      %p130 = scmp.eq.s32.totalorder %s24, 1
      %p131 = por %p129, %p130
      %p133 = scmp.ne.s32.totalorder %s118, %s132
      %p134 = scmp.eq.s32.totalorder %s24, 0
      %p135 = por %p133, %p134
      %s136 = ssub.s32 %s18, %s25
      %p137 = scmp.eq.s32.totalorder %s136, 0
      %s139 = sadd.s32 %s138, 1
      %s140 = scalar_select %p137, %s138, %s139
      %p143 = pneg %p137
      %p144 = scmp.eq.s32.totalorder %s18, 1
      %p145 = por %p143, %p144
      %p146 = scmp.ne.s32.totalorder %s138, %s141
      %p147 = scmp.eq.s32.totalorder %s18, 0
      %p148 = por %p146, %p147
      %p149 = scmp.ne.s32.totalorder %s138, %s141
      %p150 = scmp.eq.s32.totalorder %s23, 1
      %p151 = por %p149, %p150
      %p152 = scmp.ne.s32.totalorder %s141, %s142
      %p153 = scmp.eq.s32.totalorder %s23, 0
      %p154 = por %p152, %p153
      %p155 = scmp.ne.s32.totalorder %s141, %s142
      %p156 = scmp.eq.s32.totalorder %s24, 1
      %p157 = por %p155, %p156
      %p159 = scmp.ne.s32.totalorder %s142, %s158
      %p160 = scmp.eq.s32.totalorder %s24, 0
      %p161 = por %p159, %p160
      %p162 = scmp.le.s32.totalorder 1, %s18
      %p163 = scmp.lt.s32.totalorder %s18, 3
      %p164 = pnand %p162, %p163
      %p165 = pneg %p164
      // Predicated region
      $region9: #{tpu_custom_call.1} parent=5 // pred_check
        _
      $region10: #{tpu_custom_call.1} parent=5 // pred_check_branch
        %167 = sbr.rel (%p164) target = $region12
      $region11: #{tpu_custom_call.1} parent=5 // pred_region
        %s168 = ssub.s32 %s18, 1
        // Predicated region
        $region13: #{tpu_custom_call.1} parent=11 // pred_check
          %p169 = pneg %p65
        $region14: #{tpu_custom_call.1} parent=11 // pred_check_branch
          %171 = sbr.rel (%p169) target = $region16
        $region15: #{tpu_custom_call.1} parent=11 // pred_region
          %s173 = ssub.s32 128, 128
          %174 = vsyncadd [#allocation6], %s173
          %s176 = sshll.u32 [#allocation5], 4
          %s177 = int_to_ptr.vmem [resolvable:$true] %s176
          %179 = dma.hbm_to_vmem [thread:$0]  %s1, 128, %s177, [#allocation6]
        $region16: #{tpu_custom_call.1} parent=11 // pred_fallthru
          _
        // Predicated region
        $region17: #{tpu_custom_call.1} parent=11 // pred_check
          %p180 = pneg %p86
        $region18: #{tpu_custom_call.1} parent=11 // pred_check_branch
          %182 = sbr.rel (%p180) target = $region20
        $region19: #{tpu_custom_call.1} parent=11 // pred_region
          _
        $region20: #{tpu_custom_call.1} parent=11 // pred_fallthru
          _
        // Predicated region
        $region21: #{tpu_custom_call.1} parent=11 // pred_check
          %p183 = pneg %p107
        $region22: #{tpu_custom_call.1} parent=11 // pred_check_branch
          %185 = sbr.rel (%p183) target = $region24
        $region23: #{tpu_custom_call.1} parent=11 // pred_region
          _
        $region24: #{tpu_custom_call.1} parent=11 // pred_fallthru
          _
        // Predicated region
        $region25: #{tpu_custom_call.1} parent=11 // pred_check
          %p186 = pneg %p128
        $region26: #{tpu_custom_call.1} parent=11 // pred_check_branch
          %188 = sbr.rel (%p186) target = $region28
        $region27: #{tpu_custom_call.1} parent=11 // pred_region
          _
        $region28: #{tpu_custom_call.1} parent=11 // pred_fallthru
          _
      $region12: #{tpu_custom_call.1} parent=5 // pred_fallthru
        _
      %p189 = scmp.lt.s32.totalorder %s18, 2
      // Predicated region
      $region29: #{tpu_custom_call.1} parent=5 // pred_check
        %p190 = pneg %p189
      $region30: #{tpu_custom_call.1} parent=5 // pred_check_branch
        %192 = sbr.rel (%p190) target = $region32
      $region31: #{tpu_custom_call.1} parent=5 // pred_region
        // Predicated region
        $region33: #{tpu_custom_call.1} parent=31 // pred_check
          %p193 = pneg %p38
        $region34: #{tpu_custom_call.1} parent=31 // pred_check_branch
          %195 = sbr.rel (%p193) target = $region36
        $region35: #{tpu_custom_call.1} parent=31 // pred_region
          %s196 = sand.u32 %s28, 1
          %s197 = scalar_lea.sflag [#allocation3], %s196
          %s198 = sand.u32 %s28, 1
          %s199 = smul.addr %s198, 16
          %s200 = scalar_lea.vmem [#allocation2], %s199
          %s202 = ssub.s32 256, 256
          %203 = vsyncadd %s197, %s202
          %s204 = smul.addr %s18, 2
          %s205 = smul.addr %s204, 128
          %s206 = scalar_lea.hbm %s0, %s205
          %s208 = sshll.u32 %s200, 4
          %s209 = int_to_ptr.vmem [resolvable:$true] %s208
          %211 = dma.hbm_to_vmem [thread:$0]  %s206, 256, %s209, %s197
        $region36: #{tpu_custom_call.1} parent=31 // pred_fallthru
          _
      $region32: #{tpu_custom_call.1} parent=5 // pred_fallthru
        _
      %p212 = scmp.le.s32.totalorder 1, %s18
      %p213 = scmp.lt.s32.totalorder %s18, 3
      %p214 = pnand %p212, %p213
      %p215 = pneg %p214
      // Predicated region
      $region37: #{tpu_custom_call.1} parent=5 // pred_check
        _
      $region38: #{tpu_custom_call.1} parent=5 // pred_check_branch
        %217 = sbr.rel (%p214) target = $region40
      $region39: #{tpu_custom_call.1} parent=5 // pred_region
        %s218 = ssub.s32 %s18, 1
        %s219 = sand.u32 %s31, 1
        %s220 = scalar_lea.sflag [#allocation3], %s219
        %s221 = sand.u32 %s31, 1
        %s222 = smul.addr %s221, 16
        %s223 = scalar_lea.vmem [#allocation2], %s222
        // Predicated region
        $region41: #{tpu_custom_call.1} parent=39 // pred_check
          %p224 = pneg %p44
        $region42: #{tpu_custom_call.1} parent=39 // pred_check_branch
          %226 = sbr.rel (%p224) target = $region44
        $region43: #{tpu_custom_call.1} parent=39 // pred_region
          %227 = dma.done %s220, 256
        $region44: #{tpu_custom_call.1} parent=39 // pred_fallthru
          _
        // Predicated region
        $region45: #{tpu_custom_call.1} parent=39 // pred_check
          %p228 = pneg %p65
        $region46: #{tpu_custom_call.1} parent=39 // pred_check_branch
          %230 = sbr.rel (%p228) target = $region48
        $region47: #{tpu_custom_call.1} parent=39 // pred_region
          %231 = dma.done [#allocation6], 128
        $region48: #{tpu_custom_call.1} parent=39 // pred_fallthru
          _
        %s232 = sand.u32 %s31, 1
        %s233 = scalar_lea.sflag [#allocation3], %s232
        %s234 = sand.u32 %s31, 1
        %s235 = smul.addr %s234, 16
        %s236 = scalar_lea.vmem [#allocation2], %s235
        %p237 = pneg %p44
        %p238 = pneg %p41
        %p239 = pneg %p65
        %p240 = pneg %p62
        %p241 = pneg %p86
        %p242 = pneg %p83
        %p243 = pneg %p107
        %p244 = pneg %p104
        %p245 = pneg %p128
        %p246 = pneg %p125
        %p247 = pneg %p154
        %p248 = pneg %p151
        %s249 = sand.u32 %s141, 1
        %s250 = scalar_lea.sflag [#allocation4], %s249
        %s251 = sand.u32 %s141, 1
        %s252 = smul.addr %s251, 16
        %s253 = scalar_lea.vmem [#allocation7], %s252
        %v254 = vld [vmem:[%s223] sm:$0xff]
        %v255 = vld [vmem:[%s223 + $0x8] sm:$0xff]
        %v256 = vadd.f32 %v254, %v255
        %257 = vadd.xlane.f32.xlu0 %v256
        %v258 = vpop.xlane.xlu0 %257
        %v259 = vmul.f32 %v258, 0.00390625
        %v260 = vld [vmem:[#allocation5] sm:$0xff]
        %v261 = vld [vmem:[%s2] sm:$0x1]
        %v263 = vlaneseq
        %v264 = vand.u32 %v263, 127
        %v265 = vlaneseq
        %v266 = vshrl.u32 %v265, 7
        %v267 = vsub.s32 %v264, %v266
        %v268 = vrot.slane %v259, %v267
        %vm269 = vcmask 64512
        %v270 = vsel %vm269, %v268, 0
        %272 = vmatprep.subr.mxu0 0.0
        %273 = vmatpush1.msra.mxu0 %v260
        %274 = vmatprep.subr.mxu0 0.0
        %275 = vmatpush1.msra.mxu0 0.0
        %276 = vmatprep.subr.mxu0 0.0
        %277 = vmatpush1.msra.mxu0 0.0
        %278 = vmatprep.subr.mxu0 0.0
        %279 = vmatpush1.msra.mxu0 0.0
        %280 = vmatprep.subr.mxu0 0.0
        %281 = vmatpush1.msra.mxu0 0.0
        %282 = vmatprep.subr.mxu0 0.0
        %283 = vmatpush1.msra.mxu0 0.0
        %284 = vmatprep.subr.mxu0 0.0
        %285 = vmatpush1.msra.mxu0 0.0
        %286 = vmatprep.subr.mxu0 0.0
        %287 = vmatpush1.msra.mxu0 0.0
        %288 = vmatprep.subr.mxu0 0.0
        %289 = vmatpush1.msra.mxu0 0.0
        %290 = vmatprep.subr.mxu0 0.0
        %291 = vmatpush1.msra.mxu0 0.0
        %292 = vmatprep.subr.mxu0 0.0
        %293 = vmatpush1.msra.mxu0 0.0
        %294 = vmatprep.subr.mxu0 0.0
        %295 = vmatpush1.msra.mxu0 0.0
        %296 = vmatprep.subr.mxu0 0.0
        %297 = vmatpush1.msra.mxu0 0.0
        %298 = vmatprep.subr.mxu0 0.0
        %299 = vmatpush1.msra.mxu0 0.0
        %300 = vmatprep.subr.mxu0 0.0
        %301 = vmatpush1.msra.mxu0 0.0
        %302 = vmatprep.subr.mxu0 0.0
        %303 = vmatpush1.msra.mxu0 0.0
        %304 = vmatprep.subr.mxu0 0.0
        %305 = vmatpush1.msra.mxu0 0.0
        %306 = vmatprep.subr.mxu0 0.0
        %307 = vmatpush1.msra.mxu0 0.0
        %308 = vmatprep.subr.mxu0 0.0
        %309 = vmatpush1.msra.mxu0 0.0
        %310 = vmatprep.subr.mxu0 0.0
        %311 = vmatpush1.msra.mxu0 0.0
        %312 = vmatprep.subr.mxu0 0.0
        %313 = vmatpush1.msra.mxu0 0.0
        %314 = vmatprep.subr.mxu0 0.0
        %315 = vmatpush1.msra.mxu0 0.0
        %316 = vmatprep.subr.mxu0 0.0
        %317 = vmatpush1.msra.mxu0 0.0
        %318 = vmatprep.subr.mxu0 0.0
        %319 = vmatpush1.msra.mxu0 0.0
        %320 = vmatprep.subr.mxu0 0.0
        %321 = vmatpush1.msra.mxu0 0.0
        %322 = vmatprep.subr.mxu0 0.0
        %323 = vmatpush1.msra.mxu0 0.0
        %324 = vmatprep.subr.mxu0 0.0
        %325 = vmatpush1.msra.mxu0 0.0
        %326 = vmatprep.subr.mxu0 0.0
        %327 = vmatpush1.msra.mxu0 0.0
        %328 = vmatprep.subr.mxu0 0.0
        %329 = vmatpush1.msra.mxu0 0.0
        %330 = vmatprep.subr.mxu0 0.0
        %331 = vmatpush1.msra.mxu0 0.0
        %332 = vmatprep.subr.mxu0 0.0
        %333 = vmatpush1.msra.mxu0 0.0
        %334 = vmatprep.subr.mxu0 0.0
        %335 = vmatpush1.msra.mxu0 0.0
        %336 = vmatprep.mubr.f32.mxu0 0.0
        %337 = vmatmul.mubr.f32.gmra.mrb[0].mxu0 %v270
        %v338 = vpop.f32.mrb[0].mxu0
        %v339 = vadd.f32 %v261, %v338
        %v340 = vpop.f32.mrb[0].mxu0
        %341 = vdwg.mxu0
        %v342 = vmax.f32 %v339, 0.0
        %v343 = vld [vmem:[%s3] sm:$0xff]
        %v344 = vld [vmem:[%s4] sm:$0x1]
        %v346 = vsel %vm269, %v342, 0
        %348 = vmatprep.subr.mxu0 0.0
        %349 = vmatpush1.msra.mxu0 %v343
        %350 = vmatprep.subr.mxu0 0.0
        %351 = vmatpush1.msra.mxu0 0.0
        %352 = vmatprep.subr.mxu0 0.0
        %353 = vmatpush1.msra.mxu0 0.0
        %354 = vmatprep.subr.mxu0 0.0
        %355 = vmatpush1.msra.mxu0 0.0
        %356 = vmatprep.subr.mxu0 0.0
        %357 = vmatpush1.msra.mxu0 0.0
        %358 = vmatprep.subr.mxu0 0.0
        %359 = vmatpush1.msra.mxu0 0.0
        %360 = vmatprep.subr.mxu0 0.0
        %361 = vmatpush1.msra.mxu0 0.0
        %362 = vmatprep.subr.mxu0 0.0
        %363 = vmatpush1.msra.mxu0 0.0
        %364 = vmatprep.subr.mxu0 0.0
        %365 = vmatpush1.msra.mxu0 0.0
        %366 = vmatprep.subr.mxu0 0.0
        %367 = vmatpush1.msra.mxu0 0.0
        %368 = vmatprep.subr.mxu0 0.0
        %369 = vmatpush1.msra.mxu0 0.0
        %370 = vmatprep.subr.mxu0 0.0
        %371 = vmatpush1.msra.mxu0 0.0
        %372 = vmatprep.subr.mxu0 0.0
        %373 = vmatpush1.msra.mxu0 0.0
        %374 = vmatprep.subr.mxu0 0.0
        %375 = vmatpush1.msra.mxu0 0.0
        %376 = vmatprep.subr.mxu0 0.0
        %377 = vmatpush1.msra.mxu0 0.0
        %378 = vmatprep.subr.mxu0 0.0
        %379 = vmatpush1.msra.mxu0 0.0
        %380 = vmatprep.subr.mxu0 0.0
        %381 = vmatpush1.msra.mxu0 0.0
        %382 = vmatprep.subr.mxu0 0.0
        %383 = vmatpush1.msra.mxu0 0.0
        %384 = vmatprep.subr.mxu0 0.0
        %385 = vmatpush1.msra.mxu0 0.0
        %386 = vmatprep.subr.mxu0 0.0
        %387 = vmatpush1.msra.mxu0 0.0
        %388 = vmatprep.subr.mxu0 0.0
        %389 = vmatpush1.msra.mxu0 0.0
        %390 = vmatprep.subr.mxu0 0.0
        %391 = vmatpush1.msra.mxu0 0.0
        %392 = vmatprep.subr.mxu0 0.0
        %393 = vmatpush1.msra.mxu0 0.0
        %394 = vmatprep.subr.mxu0 0.0
        %395 = vmatpush1.msra.mxu0 0.0
        %396 = vmatprep.subr.mxu0 0.0
        %397 = vmatpush1.msra.mxu0 0.0
        %398 = vmatprep.subr.mxu0 0.0
        %399 = vmatpush1.msra.mxu0 0.0
        %400 = vmatprep.subr.mxu0 0.0
        %401 = vmatpush1.msra.mxu0 0.0
        %402 = vmatprep.subr.mxu0 0.0
        %403 = vmatpush1.msra.mxu0 0.0
        %404 = vmatprep.subr.mxu0 0.0
        %405 = vmatpush1.msra.mxu0 0.0
        %406 = vmatprep.subr.mxu0 0.0
        %407 = vmatpush1.msra.mxu0 0.0
        %408 = vmatprep.subr.mxu0 0.0
        %409 = vmatpush1.msra.mxu0 0.0
        %410 = vmatprep.subr.mxu0 0.0
        %411 = vmatpush1.msra.mxu0 0.0
        %412 = vmatprep.mubr.f32.mxu0 0.0
        %413 = vmatmul.mubr.f32.gmra.mrb[0].mxu0 %v346
        %v414 = vpop.f32.mrb[0].mxu0
        %v415 = vadd.f32 %v344, %v414
        %v416 = vpop.f32.mrb[0].mxu0
        %417 = vdwg.mxu0
        %v418 = vadd.f32 %v415, 3.0
        %v419 = vmax.f32 %v418, 0.0
        %v420 = vmin.f32 %v419, 6.0
        %v421 = vmul.f32 %v420, 0.16666667
        %v422 = vlaneseq
        %v423 = vshrl.u32 %v422, 7
        %v424 = vsub.s32 0, %v423
        %v425 = vrot.slane %v421, %v424
        %427 = vbcast.lane.b32.xlu0 %v425, 256
        %v428 = vpop.permute.xlu0 %427
        %v429 = vmul.f32 %v254, %v428
        %v430 = vmul.f32 %v255, %v428
        %431 = vst [vmem:[%s253] sm:$0xff] %v429
        %432 = vst [vmem:[%s253 + $0x8] sm:$0xff] %v430
        %s433 = sand.u32 %s141, 1
        %s434 = scalar_lea.sflag [#allocation4], %s433
        %s435 = sand.u32 %s141, 1
        %s436 = smul.addr %s435, 16
        %s437 = scalar_lea.vmem [#allocation7], %s436
        // Predicated region
        $region49: #{tpu_custom_call.1} parent=39 // pred_check
          %p438 = pneg %p151
        $region50: #{tpu_custom_call.1} parent=39 // pred_check_branch
          %440 = sbr.rel (%p438) target = $region52
        $region51: #{tpu_custom_call.1} parent=39 // pred_region
          %s442 = ssub.s32 256, 256
          %443 = vsyncadd %s434, %s442
          %s444 = smul.addr %s23, 2
          %s445 = smul.addr %s444, 128
          %s446 = scalar_lea.hbm %s5, %s445
          %s448 = sshll.u32 %s437, 4
          %s449 = int_to_ptr.vmem [resolvable:$true] %s448
          %451 = dma.vmem_to_hbm [thread:$0]  %s449, 256, %s446, %s434
        $region52: #{tpu_custom_call.1} parent=39 // pred_fallthru
          _
      $region40: #{tpu_custom_call.1} parent=5 // pred_fallthru
        _
      %p452 = scmp.le.s32.totalorder 2, %s18
      // Predicated region
      $region53: #{tpu_custom_call.1} parent=5 // pred_check
        %p453 = pneg %p452
      $region54: #{tpu_custom_call.1} parent=5 // pred_check_branch
        %455 = sbr.rel (%p453) target = $region56
      $region55: #{tpu_custom_call.1} parent=5 // pred_region
        %s456 = ssub.s32 %s18, 2
        // Predicated region
        $region57: #{tpu_custom_call.1} parent=55 // pred_check
          %p457 = pneg %p157
        $region58: #{tpu_custom_call.1} parent=55 // pred_check_branch
          %459 = sbr.rel (%p457) target = $region60
        $region59: #{tpu_custom_call.1} parent=55 // pred_region
          %s460 = sand.u32 %s142, 1
          %s461 = scalar_lea.sflag [#allocation4], %s460
          %s462 = sand.u32 %s142, 1
          %s463 = smul.addr %s462, 16
          %s464 = scalar_lea.vmem [#allocation7], %s463
          %465 = dma.done %s461, 256
        $region60: #{tpu_custom_call.1} parent=55 // pred_fallthru
          _
      $region56: #{tpu_custom_call.1} parent=5 // pred_fallthru
        _
    $region6: #{tpu_custom_call.1} parent=1 // loop_footer
      %s22 = sadd.s32 1, %s18
    $region7: #{tpu_custom_call.1} parent=1 // loop_footer_branch
      %17 = sbr.rel target = $region3
    $region8: #{tpu_custom_call.1} parent=1 // loop_exit
      _
    %466 = vsyncpa [#allocation3], 1
    %s467 = scalar_lea.sflag [#allocation3], 1
    %468 = vsyncpa %s467, 1
    %469 = vsyncpa [#allocation6], 1
    %470 = vsyncpa [#allocation4], 1
    %s471 = scalar_lea.sflag [#allocation4], 1
    %472 = vsyncpa %s471, 1

</llo_original>
